<compile_context>
chip_gen: v7x
topology: tpu7x:2x2x1
jax: 0.10.0
libtpu: 0.0.40
codegen_flags: <defaults>
</compile_context>

<pallas_src>
import functools

import numpy as np

import jax
import jax.numpy as jnp
from jax.experimental import pallas as pl
from jax.experimental.pallas import tpu as pltpu


# ----------------------------------------------------------------------------
# Generation-aware tiling configuration
# ----------------------------------------------------------------------------
def _round_up(x, m):
    return ((x + m - 1) // m) * m


_GEN_CONFIG = {
    # tm/tn/tk caps (lane dims multiples of 128) + scoped-VMEM ceiling we are
    # willing to request.  v7x has 64 MiB physical VMEM per TC -> lower cap.
    "v5e": dict(tm_cap=512, tn_cap=512, tk_cap=512, vmem_cap=64 << 20),
    "v6e": dict(tm_cap=768, tn_cap=768, tk_cap=512, vmem_cap=96 << 20),
    "v7x": dict(tm_cap=768, tn_cap=768, tk_cap=512, vmem_cap=48 << 20),
    "unknown": dict(tm_cap=512, tn_cap=512, tk_cap=512, vmem_cap=48 << 20),
}


def _tpu_generation():
    try:
        kind = jax.devices()[0].device_kind.lower()
    except Exception:
        return "unknown"
    if "v5 lite" in kind or "v5e" in kind or "v5lite" in kind:
        return "v5e"
    if "v6" in kind:
        return "v6e"
    if "7x" in kind or "v7" in kind or "tpu7" in kind:
        return "v7x"
    return "unknown"


_GEN = _tpu_generation()
_CFG = _GEN_CONFIG[_GEN]


def _plan_kn(K, N):
    """Tile sizes along K (contraction) and N (output lane axis).

    Depends only on (K, N) and the TPU generation, so weights can be padded
    once at parameter-initialization time and reused for every forward call.
    """
    tk = min(_CFG["tk_cap"], _round_up(K, 128))
    tn = min(_CFG["tn_cap"], _round_up(N, 128))
    if _GEN == "v7x":
        # 2 TensorCores per chip: make sure there are >=2 N tiles whenever N
        # is wide enough, so a single-output-tile grid doesn't idle one core.
        nr = _round_up(N, 128)
        if nr >= 256 and nr <= tn:
            tn = 128 * ((nr // 128 + 1) // 2)
    return tk, tn


def _plan_m(M):
    # Small-M (decode-style) shapes keep tm = round_up(M, 8) instead of
    # padding the batch up to the cap.
    return min(_CFG["tm_cap"], _round_up(M, 8))


# ----------------------------------------------------------------------------
# Pallas kernel: tiled dense forward  y = x @ W + b
# ----------------------------------------------------------------------------
def dense_kernel(x_ref, w_ref, b_ref, o_ref, acc_ref):
    # x_ref: (tm, tk) compute dtype, w_ref: (tk, tn) compute dtype,
    # b_ref: (1, tn) f32, o_ref: (tm, tn) out dtype, acc_ref: (tm, tn) f32.
    k = pl.program_id(2)

    prod = jnp.dot(x_ref[...], w_ref[...], preferred_element_type=jnp.float32)

    # Direct write on the first K step (saves a zeros pass + an add pass over
    # the f32 accumulator tile), accumulate afterwards.
    @pl.when(k == 0)
    def _():
        acc_ref[...] = prod

    @pl.when(k > 0)
    def _():
        acc_ref[...] += prod

    @pl.when(k == pl.num_programs(2) - 1)
    def _():
        # Bias added exactly once, in f32, then cast on store.
        o_ref[...] = (acc_ref[...] + b_ref[...]).astype(o_ref.dtype)


@functools.partial(jax.jit, static_argnames=("n", "out_dtype", "compute_dtype"))
def _dense_forward_padded(x, w_p, b_p, *, n, out_dtype, compute_dtype):
    """y = x @ W + b with W/b already cast+padded to the tile plan.

    x:   (M, K)  any float dtype (cast to compute_dtype if needed)
    w_p: (Kp, Np) compute_dtype, pre-padded
    b_p: (1, Np)  f32, pre-padded
    returns (M, n) out_dtype
    """
    M, K = x.shape
    Kp, Np = w_p.shape
    tk, tn = _plan_kn(K, n)
    tm = _plan_m(M)
    assert Kp == _round_up(K, tk) and Np == _round_up(n, tn), (
        "pre-padded weight does not match the tile plan")
    Mp = _round_up(M, tm)

    # Cast / pad x only when actually required (no extra XLA pass otherwise).
    if x.dtype != np.dtype(compute_dtype):
        x = x.astype(compute_dtype)
    if (Mp, Kp) != (M, K):
        x = jnp.pad(x, ((0, Mp - M), (0, Kp - K)))

    grid = (Mp // tm, Np // tn, Kp // tk)
    n_i, n_j, n_k = grid

    # Deeper buffering on the weight stream for the small-M (weight-streaming,
    # HBM-bound) regime so the W DMA is never exposed.
    use_deep_w = (M <= 128) and (n_j * n_k >= 3)
    if use_deep_w:
        w_spec = pl.BlockSpec((tk, tn), lambda i, j, k: (k, j),
                              pipeline_mode=pl.Buffered(3))
    else:
        w_spec = pl.BlockSpec((tk, tn), lambda i, j, k: (k, j))

    c_item = np.dtype(compute_dtype).itemsize
    o_item = np.dtype(out_dtype).itemsize

    # Actual streamed HBM traffic: each operand is re-read once per reuse of
    # the other matmul dimension.
    cost = pl.CostEstimate(
        flops=2 * Mp * Kp * Np,
        transcendentals=0,
        bytes_accessed=(Mp * Kp * c_item) * n_j
        + (Kp * Np * c_item) * n_i
        + (Np * 4) * n_i
        + Mp * Np * o_item,
    )

    # VMEM budget: double-buffered inputs/outputs + f32 accumulator + headroom.
    w_bufs = 3 if use_deep_w else 2
    need = (2 * tm * tk * c_item          # x tiles (double-buffered)
            + w_bufs * tk * tn * c_item   # W tiles
            + 2 * 8 * tn * 4              # bias tiles (padded sublane)
            + 2 * tm * tn * o_item        # output tiles
            + tm * tn * 4)                # f32 accumulator scratch
    vmem_limit = min(_CFG["vmem_cap"], max(need + (4 << 20), 32 << 20))

    out_p = pl.pallas_call(
        dense_kernel,
        out_shape=jax.ShapeDtypeStruct((Mp, Np), out_dtype),
        grid_spec=pltpu.PrefetchScalarGridSpec(
            num_scalar_prefetch=0,
            grid=grid,
            in_specs=[
                pl.BlockSpec((tm, tk), lambda i, j, k: (i, k)),  # x
                w_spec,                                          # W
                pl.BlockSpec((1, tn), lambda i, j, k: (0, j)),   # b
            ],
            out_specs=pl.BlockSpec((tm, tn), lambda i, j, k: (i, j)),
            scratch_shapes=[pltpu.VMEM((tm, tn), jnp.float32)],
        ),
        compiler_params=pltpu.CompilerParams(
            dimension_semantics=("parallel", "parallel", "arbitrary"),
            vmem_limit_bytes=int(vmem_limit),
        ),
        cost_estimate=cost,
    )(x, w_p, b_p)

    if (Mp, Np) != (M, n):
        out_p = out_p[:M, :n]
    return out_p


# ----------------------------------------------------------------------------
# JAX-side mirror of the PyTorch classes
# ----------------------------------------------------------------------------
class InnerDenseModel:
    """Representative inner `model` handed to BaseModule (y = x @ W + b)."""

    def __init__(self, hidden_in, hidden_out, key,
                 compute_dtype=jnp.bfloat16, out_dtype=jnp.bfloat16):
        k_w, k_b = jax.random.split(key)
        self.hidden_in = hidden_in
        self.hidden_out = hidden_out
        self.compute_dtype = compute_dtype
        self.out_dtype = out_dtype

        # Deterministic synthetic init (not a checkpoint load).
        self.w = (jax.random.normal(k_w, (hidden_in, hidden_out), jnp.float32)
                  * (1.0 / jnp.sqrt(hidden_in)))
        self.b = jax.random.normal(k_b, (hidden_out,), jnp.float32) * 0.01

        # Cast + pad ONCE here (not per forward call): removes a full extra
        # weight HBM round trip from every call.
        tk, tn = _plan_kn(hidden_in, hidden_out)
        Kp, Np = _round_up(hidden_in, tk), _round_up(hidden_out, tn)
        self.w_padded = jnp.pad(
            self.w.astype(compute_dtype),
            ((0, Kp - hidden_in), (0, Np - hidden_out)))
        self.b_padded = jnp.pad(
            self.b.astype(jnp.float32).reshape(1, hidden_out),
            ((0, 0), (0, Np - hidden_out)))
        # TODO(synk): on v7x, W could additionally be quantized to fp8 with
        # per-output-channel scales for another 2x on weight HBM bytes.

    def __call__(self, x):
        return _dense_forward_padded(
            x, self.w_padded, self.b_padded,
            n=self.hidden_out,
            out_dtype=self.out_dtype,
            compute_dtype=self.compute_dtype)


class BaseModule:
    """JAX analogue of models/base.py BaseModule."""

    def __init__(self, config, name, model):
        self.model = model
        ckpt = config["checkpoint"]
        self.in_checkpoint_path = ckpt["in_{}_checkpoint_path".format(name)]
        self.in_weight_path = ckpt["in_{}_weight_path".format(name)]
        self.out_checkpoint_path = ckpt["out_{}_checkpoint_path".format(name)]
        self.out_weight_path = ckpt["out_{}_weight_path".format(name)]

    def forward(self, *args):
        # Exact semantics of the PyTorch forward: delegate to the wrapped model.
        out = self.model(*args)
        return out

    __call__ = forward

    # TODO(synk): load_parameters / load_out_parameters / save_parameters are
    # filesystem checkpoint I/O with no device compute; intentionally omitted.


# ----------------------------------------------------------------------------
if __name__ == "__main__":
    key = jax.random.PRNGKey(0)
    k_x, k_m = jax.random.split(key)

    batch, hidden = 8, 32
    x = jax.random.normal(k_x, (batch, hidden), jnp.float32)

    config = {
        "checkpoint": {
            "in_demo_checkpoint_path": "/nonexistent/in_ckpt",
            "in_demo_weight_path": "/nonexistent/in_weight",
            "out_demo_checkpoint_path": "/nonexistent/out_ckpt",
            "out_demo_weight_path": "/nonexistent/out_weight",
        }
    }

    inner = InnerDenseModel(hidden, hidden, k_m)
    module = BaseModule(config, "demo", inner)

    out = module(x)
    out = jax.block_until_ready(out)

    # Reference: same bf16-cast operands, f32 accumulation (matches the
    # kernel's compute_dtype / preferred_element_type behavior); the kernel
    # output is bf16, so compare with bf16-level tolerance.
    x_bf = x.astype(jnp.bfloat16).astype(jnp.float32)
    w_bf = inner.w.astype(jnp.bfloat16).astype(jnp.float32)
    ref = x_bf @ w_bf + inner.b

    assert out.shape == (batch, hidden)
    assert out.dtype == jnp.bfloat16
    assert jnp.allclose(out.astype(jnp.float32), ref, atol=3e-2, rtol=3e-2)

    print("KERNEL_OK")
</pallas_src>

<mosaic_0001>
module attributes {stable_mosaic.version = 11 : i64} {
  func.func @dense_kernel(%arg0: i32, %arg1: i32, %arg2: i32, %arg3: memref<8x128xbf16, #tpu.memory_space<vmem>>, %arg4: memref<128x128xbf16, #tpu.memory_space<vmem>>, %arg5: memref<1x128xf32, #tpu.memory_space<vmem>>, %arg6: memref<8x128xbf16, #tpu.memory_space<vmem>>, %arg7: memref<8x128xf32, #tpu.memory_space<vmem>>) attributes {dimension_semantics = [#tpu.dimension_semantics<parallel>, #tpu.dimension_semantics<parallel>, #tpu.dimension_semantics<arbitrary>], iteration_bounds = array<i64: 1, 1, 1>, scalar_prefetch = 0 : i64, scratch_operands = 1 : i64, tpu.core_type = #tpu.core_type<tc>, window_params = [{transform_indices = @transform_0, window_bounds = array<i64: 8, 128>}, {transform_indices = @transform_1, window_bounds = array<i64: 128, 128>}, {transform_indices = @transform_2, window_bounds = array<i64: 1, 128>}, {transform_indices = @transform_3, window_bounds = array<i64: 8, 128>}]} {
    %c0 = arith.constant 0 : index
    %c0_0 = arith.constant 0 : index
    %0 = vector.load %arg3[%c0, %c0_0] : memref<8x128xbf16, #tpu.memory_space<vmem>>, vector<8x128xbf16>
    %c0_1 = arith.constant 0 : index
    %c0_2 = arith.constant 0 : index
    %1 = vector.load %arg4[%c0_1, %c0_2] : memref<128x128xbf16, #tpu.memory_space<vmem>>, vector<128x128xbf16>
    %cst = arith.constant dense<0.000000e+00> : vector<8x128xf32>
    %2 = tpu.matmul %0, %1, %cst {dimension_numbers = #tpu.dot_dimension_numbers<[1], [0], [0], [1], [0, 0, 1, 1], [], []>} : vector<8x128xbf16>, vector<128x128xbf16>, vector<8x128xf32> -> vector<8x128xf32>
    %c0_i32 = arith.constant 0 : i32
    %3 = arith.cmpi eq, %arg2, %c0_i32 : i32
    %4 = arith.extui %3 : i1 to i32
    %c0_i32_3 = arith.constant 0 : i32
    %5 = arith.cmpi ne, %4, %c0_i32_3 : i32
    scf.if %5 {
      %c0_8 = arith.constant 0 : index
      %c0_9 = arith.constant 0 : index
      %12 = vector.load %arg7[%c0_8, %c0_9] : memref<8x128xf32, #tpu.memory_space<vmem>>, vector<8x128xf32>
      tpu.vector_store %arg7[%c0_8, %c0_9], %2 {strides = array<i32>} : memref<8x128xf32, #tpu.memory_space<vmem>>, vector<8x128xf32>,
    } else {
    }
    %c0_i32_4 = arith.constant 0 : i32
    %6 = arith.cmpi sgt, %arg2, %c0_i32_4 : i32
    %7 = arith.extui %6 : i1 to i32
    %c0_i32_5 = arith.constant 0 : i32
    %8 = arith.cmpi ne, %7, %c0_i32_5 : i32
    scf.if %8 {
      %c0_8 = arith.constant 0 : index
      %c0_9 = arith.constant 0 : index
      %12 = vector.load %arg7[%c0_8, %c0_9] : memref<8x128xf32, #tpu.memory_space<vmem>>, vector<8x128xf32>
      %13 = arith.addf %12, %2 : vector<8x128xf32>
      %c0_10 = arith.constant 0 : index
      %c0_11 = arith.constant 0 : index
      %14 = vector.load %arg7[%c0_10, %c0_11] : memref<8x128xf32, #tpu.memory_space<vmem>>, vector<8x128xf32>
      tpu.vector_store %arg7[%c0_10, %c0_11], %13 {strides = array<i32>} : memref<8x128xf32, #tpu.memory_space<vmem>>, vector<8x128xf32>,
    } else {
    }
    %c0_i32_6 = arith.constant 0 : i32
    %9 = arith.cmpi eq, %arg2, %c0_i32_6 : i32
    %10 = arith.extui %9 : i1 to i32
    %c0_i32_7 = arith.constant 0 : i32
    %11 = arith.cmpi ne, %10, %c0_i32_7 : i32
    scf.if %11 {
      %c0_8 = arith.constant 0 : index
      %c0_9 = arith.constant 0 : index
      %12 = vector.load %arg7[%c0_8, %c0_9] : memref<8x128xf32, #tpu.memory_space<vmem>>, vector<8x128xf32>
      %c0_10 = arith.constant 0 : index
      %c0_11 = arith.constant 0 : index
      %13 = vector.load %arg5[%c0_10, %c0_11] : memref<1x128xf32, #tpu.memory_space<vmem>>, vector<1x128xf32>
      %14 = vector.broadcast %13 : vector<1x128xf32> to vector<8x128xf32>
      %15 = arith.addf %12, %14 : vector<8x128xf32>
      %16 = arith.truncf %15 : vector<8x128xf32> to vector<8x128xbf16>
      %c0_12 = arith.constant 0 : index
      %c0_13 = arith.constant 0 : index
      %17 = vector.load %arg6[%c0_12, %c0_13] : memref<8x128xbf16, #tpu.memory_space<vmem>>, vector<8x128xbf16>
      tpu.vector_store %arg6[%c0_12, %c0_13], %16 {strides = array<i32>} : memref<8x128xbf16, #tpu.memory_space<vmem>>, vector<8x128xbf16>,
    } else {
    }
    return
  }
  func.func @transform_0(%arg0: i32, %arg1: i32, %arg2: i32) -> (i32, i32) {
    %c0_i32 = arith.constant 0 : i32
    return %arg0, %arg2 : i32, i32
  }
  func.func @transform_1(%arg0: i32, %arg1: i32, %arg2: i32) -> (i32, i32) {
    %c0_i32 = arith.constant 0 : i32
    return %arg2, %arg1 : i32, i32
  }
  func.func @transform_2(%arg0: i32, %arg1: i32, %arg2: i32) -> (i32, i32) {
    %c0_i32 = arith.constant 0 : i32
    %c0_i32_0 = arith.constant 0 : i32
    return %c0_i32, %arg1 : i32, i32
  }
  func.func @transform_3(%arg0: i32, %arg1: i32, %arg2: i32) -> (i32, i32) {
    %c0_i32 = arith.constant 0 : i32
    return %arg0, %arg1 : i32, i32
  }
}

</mosaic_0001>

<llo_original>
// kernel: _dense_forward_padded.1
$region0: #{_dense_forward_padded.1}
  #allocation0 [shape = 'u32[]', space=smem, size = 0x4, offset = 0x4, fixed_abs, tag = 'smem constant byte address 0x4 - core index']
  #allocation1 [shape = 'u32[144,128]{1,0:T(1,128)}', space=vmem, size = 0x12000, scoped, tag = 'internal scratch']
  #allocation2 [shape = 'f32[8,128]{1,0:T(8,128)}', space=vmem, size = 0x1000, scoped, tag = 'scratch operand']
  %s0 = inlined_call_operand.vmem [shape: bf16[8,128], index: 0, kind: input, shape index: {}]
  %s1 = inlined_call_operand.hbm [shape: bf16[128,128], index: 1, kind: input, shape index: {}]
  %s2 = inlined_call_operand.vmem [shape: f32[1,128], index: 2, kind: input, shape index: {}]
  %s3 = inlined_call_operand.hbm [shape: bf16[8,128], index: 3, kind: output, shape index: {}]
  %s4 = sld [smem:[#allocation0]]
  $region38: #{_dense_forward_padded.1} parent=0
    _
  %s6 = ssub.s32 1, %s4
  %s7 = scalar_select 0, %s6, %s4
  $region1: #{_dense_forward_padded.1} parent=0
    #allocation3 [shape = 'u8[32768]{0}', space=vmem, size = 0x8000, scoped, tag = 'input window, operand 1, single buffered']
    #allocation4 [shape = 's32[1]{0}', space=sflag, size = 0x4, scoped, tag = 'scoped memory for _dense_forward_padded.1']
    #allocation5 [shape = 's32[1]{0}', space=sflag, size = 0x4, scoped, tag = 'scoped memory for _dense_forward_padded.1']
    #allocation6 [shape = 'u8[2048]{0}', space=vmem, size = 0x800, scoped, tag = 'output window, operand 0, single buffered']
    %8 = vsyncpa [#allocation4], 0
    %9 = vsyncpa [#allocation5], 0
    // Predicated region
    $region2: #{_dense_forward_padded.1} parent=1 // pred_check
      _
    $region3: #{_dense_forward_padded.1} parent=1 // pred_check_branch
      %11 = sbr.rel (0) target = $region5
    $region4: #{_dense_forward_padded.1} parent=1 // pred_region
      _
    $region5: #{_dense_forward_padded.1} parent=1 // pred_fallthru
      _
    // Predicated region
    $region6: #{_dense_forward_padded.1} parent=1 // pred_check
      _
    $region7: #{_dense_forward_padded.1} parent=1 // pred_check_branch
      %13 = sbr.rel (0) target = $region9
    $region8: #{_dense_forward_padded.1} parent=1 // pred_region
      %s15 = ssub.s32 1024, 1024
      %16 = vsyncadd [#allocation4], %s15
      %s17 = sshll.u32 [#allocation3], 4
      %s18 = int_to_ptr.vmem [resolvable:$true] %s17
      %23 = dma.hbm_to_vmem [thread:$0]  %s1, 1024, %s18, [#allocation4], 64, 64, 4
    $region9: #{_dense_forward_padded.1} parent=1 // pred_fallthru
      _
    // Predicated region
    $region10: #{_dense_forward_padded.1} parent=1 // pred_check
      _
    $region11: #{_dense_forward_padded.1} parent=1 // pred_check_branch
      %25 = sbr.rel (0) target = $region13
    $region12: #{_dense_forward_padded.1} parent=1 // pred_region
      _
    $region13: #{_dense_forward_padded.1} parent=1 // pred_fallthru
      _
    // Predicated region
    $region14: #{_dense_forward_padded.1} parent=1 // pred_check
      _
    $region15: #{_dense_forward_padded.1} parent=1 // pred_check_branch
      %27 = sbr.rel (0) target = $region17
    $region16: #{_dense_forward_padded.1} parent=1 // pred_region
      %28 = dma.done [#allocation4], 1024
    $region17: #{_dense_forward_padded.1} parent=1 // pred_fallthru
      _
    %v30 = vld [vmem:[%s0] sm:$0xf]
    %v31 = vld [vmem:[#allocation3] sm:$0xf]
    %v32 = vld [vmem:[#allocation3 + $0x4] sm:$0xf]
    %v33 = vld [vmem:[#allocation3 + $0x8] sm:$0xf]
    %v34 = vld [vmem:[#allocation3 + $0xc] sm:$0xf]
    %v35 = vld [vmem:[#allocation3 + $0x10] sm:$0xf]
    %v36 = vld [vmem:[#allocation3 + $0x14] sm:$0xf]
    %v37 = vld [vmem:[#allocation3 + $0x18] sm:$0xf]
    %v38 = vld [vmem:[#allocation3 + $0x1c] sm:$0xf]
    %v39 = vld [vmem:[#allocation3 + $0x20] sm:$0xf]
    %v40 = vld [vmem:[#allocation3 + $0x24] sm:$0xf]
    %v41 = vld [vmem:[#allocation3 + $0x28] sm:$0xf]
    %v42 = vld [vmem:[#allocation3 + $0x2c] sm:$0xf]
    %v43 = vld [vmem:[#allocation3 + $0x30] sm:$0xf]
    %v44 = vld [vmem:[#allocation3 + $0x34] sm:$0xf]
    %v45 = vld [vmem:[#allocation3 + $0x38] sm:$0xf]
    %v46 = vld [vmem:[#allocation3 + $0x3c] sm:$0xf]
    %v63 = vunpack.c.l.b16 %v31
    %v64 = vunpack.c.l.b16 %v32
    %v65 = vunpack.c.l.b16 %v33
    %v66 = vunpack.c.l.b16 %v34
    %v67 = vunpack.c.l.b16 %v35
    %v68 = vunpack.c.l.b16 %v36
    %v69 = vunpack.c.l.b16 %v37
    %v70 = vunpack.c.l.b16 %v38
    %v71 = vunpack.c.l.b16 %v39
    %v72 = vunpack.c.l.b16 %v40
    %v73 = vunpack.c.l.b16 %v41
    %v74 = vunpack.c.l.b16 %v42
    %v75 = vunpack.c.l.b16 %v43
    %v76 = vunpack.c.l.b16 %v44
    %v77 = vunpack.c.l.b16 %v45
    %v78 = vunpack.c.l.b16 %v46
    %v79 = vpack.c.b16 %v64, %v63
    %v80 = vpack.c.b16 %v66, %v65
    %v81 = vpack.c.b16 %v68, %v67
    %v82 = vpack.c.b16 %v70, %v69
    %v83 = vpack.c.b16 %v72, %v71
    %v84 = vpack.c.b16 %v74, %v73
    %v85 = vpack.c.b16 %v76, %v75
    %v86 = vpack.c.b16 %v78, %v77
    %95 = vmatprep.subr.bf16.mxu0 0
    %96 = vmatpush1.bf16.msra.mxu0 %v79
    %97 = vmatprep.subr.bf16.mxu0 0
    %98 = vmatpush1.bf16.msra.mxu0 %v80
    %99 = vmatprep.subr.bf16.mxu0 0
    %100 = vmatpush1.bf16.msra.mxu0 %v81
    %101 = vmatprep.subr.bf16.mxu0 0
    %102 = vmatpush1.bf16.msra.mxu0 %v82
    %103 = vmatprep.subr.bf16.mxu0 0
    %104 = vmatpush1.bf16.msra.mxu0 %v83
    %105 = vmatprep.subr.bf16.mxu0 0
    %106 = vmatpush1.bf16.msra.mxu0 %v84
    %107 = vmatprep.subr.bf16.mxu0 0
    %108 = vmatpush1.bf16.msra.mxu0 %v85
    %109 = vmatprep.subr.bf16.mxu0 0
    %110 = vmatpush1.bf16.msra.mxu0 %v86
    %111 = vmatprep.subr.bf16.mxu0 0
    %112 = vmatpush1.bf16.msra.mxu0 0
    %113 = vmatprep.subr.bf16.mxu0 0
    %114 = vmatpush1.bf16.msra.mxu0 0
    %115 = vmatprep.subr.bf16.mxu0 0
    %116 = vmatpush1.bf16.msra.mxu0 0
    %117 = vmatprep.subr.bf16.mxu0 0
    %118 = vmatpush1.bf16.msra.mxu0 0
    %119 = vmatprep.subr.bf16.mxu0 0
    %120 = vmatpush1.bf16.msra.mxu0 0
    %121 = vmatprep.subr.bf16.mxu0 0
    %122 = vmatpush1.bf16.msra.mxu0 0
    %123 = vmatprep.subr.bf16.mxu0 0
    %124 = vmatpush1.bf16.msra.mxu0 0
    %125 = vmatprep.subr.bf16.mxu0 0
    %126 = vmatpush1.bf16.msra.mxu0 0
    %127 = vmatprep.mubr.bf16.mxu0 0
    %128 = vmatmul.mubr.bf16.gmra.mrb[0].mxu0 %v30
    %v129 = vpop.f32.mrb[0].mxu0
    %v130 = vadd.f32 0.0, %v129
    %v131 = vpop.f32.mrb[0].mxu0
    %v132 = vpop.f32.mrb[0].mxu0
    %v133 = vpop.f32.mrb[0].mxu0
    %134 = vdwg.mxu0
    %p135 = scmp.eq.s32.totalorder 0, 0
    // Predicated region
    $region18: #{_dense_forward_padded.1} parent=1 // pred_check
      %p136 = pneg %p135
    $region19: #{_dense_forward_padded.1} parent=1 // pred_check_branch
      %138 = sbr.rel (%p136) target = $region21
    $region20: #{_dense_forward_padded.1} parent=1 // pred_region
      %139 = vst [vmem:[#allocation2] sm:$0xff] %v130
    $region21: #{_dense_forward_padded.1} parent=1 // pred_fallthru
      _
    %p140 = scmp.gt.s32.totalorder 0, 0
    // Predicated region
    $region22: #{_dense_forward_padded.1} parent=1 // pred_check
      %p141 = pneg %p140
    $region23: #{_dense_forward_padded.1} parent=1 // pred_check_branch
      %143 = sbr.rel (%p141) target = $region25
    $region24: #{_dense_forward_padded.1} parent=1 // pred_region
      %v144 = vld [vmem:[#allocation2] sm:$0xff]
      %v145 = vadd.f32 %v144, %v130
      %146 = vst [vmem:[#allocation2] sm:$0xff] %v145
    $region25: #{_dense_forward_padded.1} parent=1 // pred_fallthru
      _
    // Predicated region
    $region26: #{_dense_forward_padded.1} parent=1 // pred_check
      %p147 = pneg %p135
    $region27: #{_dense_forward_padded.1} parent=1 // pred_check_branch
      %149 = sbr.rel (%p147) target = $region29
    $region28: #{_dense_forward_padded.1} parent=1 // pred_region
      %v150 = vld [vmem:[#allocation2] sm:$0xff]
      %v151 = vld [vmem:[%s2] sm:$0x1]
      %v153 = vlaneseq
      %v154 = vshrl.u32 %v153, 7
      %v155 = vsub.s32 0, %v154
      %v156 = vrot.slane %v151, %v155
      %v158 = vadd.f32 %v150, %v156
      %v159 = vpack.c.bf16 %v158, %v158
      %160 = vst [vmem:[#allocation6] sm:$0xf] %v159
    $region29: #{_dense_forward_padded.1} parent=1 // pred_fallthru
      _
    // Predicated region
    $region30: #{_dense_forward_padded.1} parent=1 // pred_check
      _
    $region31: #{_dense_forward_padded.1} parent=1 // pred_check_branch
      %162 = sbr.rel (0) target = $region33
    $region32: #{_dense_forward_padded.1} parent=1 // pred_region
      %s164 = ssub.s32 64, 64
      %165 = vsyncadd [#allocation5], %s164
      %s167 = sshll.u32 [#allocation6], 4
      %s168 = int_to_ptr.vmem [resolvable:$true] %s167
      %170 = dma.vmem_to_hbm [thread:$0]  %s168, 64, %s3, [#allocation5]
    $region33: #{_dense_forward_padded.1} parent=1 // pred_fallthru
      _
    // Predicated region
    $region34: #{_dense_forward_padded.1} parent=1 // pred_check
      _
    $region35: #{_dense_forward_padded.1} parent=1 // pred_check_branch
      %172 = sbr.rel (0) target = $region37
    $region36: #{_dense_forward_padded.1} parent=1 // pred_region
      %173 = dma.done [#allocation5], 64
    $region37: #{_dense_forward_padded.1} parent=1 // pred_fallthru
      _
    %174 = vsyncpa [#allocation4], 1
    %175 = vsyncpa [#allocation5], 1

</llo_original>
